<compile_context>
chip_gen: v5e
topology: v5e:2x2
jax: 0.10.0
libtpu: 0.0.40
codegen_flags: <defaults>
</compile_context>

<pallas_src>
import functools

import jax
import jax.numpy as jnp
from jax.experimental import pallas as pl
from jax.experimental.pallas import tpu as pltpu


def _gdl_kernel(x_ref, t_ref, out_ref, tsum_acc, isum_acc, inter_acc, *,
                smooth, s_orig, tile_s):
    # x_ref:   (1, C_total, TS)  logits tile (native dtype, cast here)
    # t_ref:   (1, 1, TS)        int32 labels tile
    # out_ref: (1, 1, C_total)   per-(n, c) dice, written on the last S-step
    # *_acc:   (1, C_total) f32  running spatial sums (VMEM scratch)
    s_id = pl.program_id(1)
    n_s = pl.num_programs(1)

    @pl.when(s_id == 0)
    def _init():
        tsum_acc[...] = jnp.zeros_like(tsum_acc)
        isum_acc[...] = jnp.zeros_like(isum_acc)
        inter_acc[...] = jnp.zeros_like(inter_acc)

    x = x_ref[...].astype(jnp.float32)          # (1, C, TS)
    t = t_ref[...]                              # (1, 1, TS) int32
    c_total = x.shape[1]

    # channel softmax: one reciprocal per (n, s) instead of a full (C, TS) divide
    m = jnp.max(x, axis=1, keepdims=True)
    e = jnp.exp(x - m)
    denom = jnp.sum(e, axis=1, keepdims=True)   # (1, 1, TS)
    p = e * pl.reciprocal(denom, approx=True)   # (1, C, TS)

    # one-hot as a boolean mask only (no f32 (C, TS) temporary for the labels)
    cls = jax.lax.broadcasted_iota(jnp.int32, (1, c_total, tile_s), 1)
    onehot_mask = (t == cls)                    # (1, C, TS) bool

    if s_orig % tile_s != 0:
        # last tile is padded in the wrapper; mask the padded lanes out
        pos = s_id * tile_s + jax.lax.broadcasted_iota(
            jnp.int32, (1, 1, tile_s), 2)
        valid = pos < s_orig
        onehot_mask = jnp.logical_and(onehot_mask, valid)
        p = jnp.where(valid, p, 0.0)

    tsum_acc[...] += jnp.sum(jnp.where(onehot_mask, 1.0, 0.0), axis=2)
    isum_acc[...] += jnp.sum(p, axis=2)
    inter_acc[...] += jnp.sum(jnp.where(onehot_mask, p, 0.0), axis=2)

    @pl.when(s_id == n_s - 1)
    def _finalize():
        tsum = tsum_acc[...]                    # (1, C)
        isum = isum_acc[...]
        inter = inter_acc[...]
        weight = 1.0 / (tsum * tsum + smooth)
        intersection = weight * inter
        union = isum + tsum
        dice = (2.0 * weight * intersection + smooth) / (weight * union + smooth)
        out_ref[...] = dice.reshape(1, 1, -1)


def gdl_loss(input_nchw, target_nhw, smooth=0.0001, reduce="mean", tile_s=None):
    """input_nchw: (N, C_total, H, W) logits (any float dtype);
    target_nhw: (N, H, W) integer labels in [0, C_total)."""
    n, c_total, h, w = input_nchw.shape
    s = h * w

    # keep native dtype (e.g. bf16) -- cast per tile inside the kernel
    x = input_nchw.reshape(n, c_total, s)
    t = target_nhw.reshape(n, 1, s).astype(jnp.int32)

    # spatial tile: multiple of 128 lanes, ~128K f32 elems of logits per tile
    # (<= 8192 lanes), never more than the 128-rounded spatial extent.
    s_rounded = pl.cdiv(s, 128) * 128
    if tile_s is None:
        tile_s = min(8192, max(128, 131072 // max(c_total, 1)))
    tile_s = min(tile_s, s_rounded)
    tile_s = max(128, (tile_s // 128) * 128)

    s_pad = pl.cdiv(s, tile_s) * tile_s
    if s_pad != s:
        x = jnp.pad(x, ((0, 0), (0, 0), (0, s_pad - s)))
        t = jnp.pad(t, ((0, 0), (0, 0), (0, s_pad - s)))
    num_s = s_pad // tile_s

    kernel = functools.partial(
        _gdl_kernel, smooth=float(smooth), s_orig=s, tile_s=tile_s)

    dice_all = pl.pallas_call(
        kernel,
        out_shape=jax.ShapeDtypeStruct((n, 1, c_total), jnp.float32),
        grid_spec=pltpu.PrefetchScalarGridSpec(
            num_scalar_prefetch=0,
            grid=(n, num_s),
            in_specs=[
                pl.BlockSpec((1, c_total, tile_s), lambda i, j: (i, 0, j)),
                pl.BlockSpec((1, 1, tile_s), lambda i, j: (i, 0, j)),
            ],
            out_specs=pl.BlockSpec((1, 1, c_total), lambda i, j: (i, 0, 0)),
            scratch_shapes=[
                pltpu.VMEM((1, c_total), jnp.float32),   # tsum
                pltpu.VMEM((1, c_total), jnp.float32),   # isum
                pltpu.VMEM((1, c_total), jnp.float32),   # inter
            ],
        ),
        compiler_params=pltpu.CompilerParams(
            dimension_semantics=("parallel", "arbitrary")),
    )(x, t)

    # tiny final combine (per-(n, c) partials -> scalar) in plain JAX
    dice_fg = dice_all[:, 0, 1:]                # drop background channel
    if reduce == "mean":
        return 1.0 - jnp.mean(dice_fg)
    elif reduce == "sum":
        return jnp.float32(n) - jnp.sum(dice_fg)
    else:
        raise ValueError(f"unsupported reduce={reduce!r}")


def _gdl_reference(input_nchw, target_nhw, smooth=0.0001, reduce="mean"):
    # Pure-JAX reference mirroring the PyTorch module exactly.
    n = target_nhw.shape[0]
    c_total = input_nchw.shape[1]
    c = c_total - 1
    one_hot = jax.nn.one_hot(target_nhw, c_total, axis=1, dtype=jnp.float32)[:, 1:]
    probs = jax.nn.softmax(input_nchw.astype(jnp.float32), axis=1)[:, 1:]
    iflat = probs.reshape(n, c, -1)
    tflat = one_hot.reshape(n, c, -1)
    weight = 1.0 / (tflat.sum(axis=2) ** 2 + smooth)
    intersection = weight * (iflat * tflat).sum(axis=2)
    union = iflat.sum(axis=2) + tflat.sum(axis=2)
    dice = (2.0 * weight * intersection + smooth) / (weight * union + smooth)
    if reduce == "mean":
        return 1.0 - dice.mean()
    return n - dice.sum()


if __name__ == "__main__":
    key = jax.random.PRNGKey(0)
    k_x, k_t, k_x2, k_t2 = jax.random.split(key, 4)

    # tolerance is loose-ish because the kernel uses the EUP approximate
    # reciprocal in the softmax (pl.reciprocal(approx=True))
    RTOL = ATOL = 2e-3

    # (a) f32 logits, tile_s=128 -> grid (2, 2), exercises the accumulator path
    N, C_TOTAL, H, W = 2, 4, 16, 16
    x = jax.random.normal(k_x, (N, C_TOTAL, H, W), dtype=jnp.float32)
    target = jax.random.randint(k_t, (N, H, W), 0, C_TOTAL, dtype=jnp.int32)

    loss = jax.block_until_ready(
        gdl_loss(x, target, smooth=0.0001, reduce="mean", tile_s=128))
    ref = _gdl_reference(x, target, smooth=0.0001, reduce="mean")
    assert jnp.isfinite(loss), "kernel produced non-finite loss (mean)"
    assert jnp.allclose(loss, ref, rtol=RTOL, atol=ATOL), (loss, ref)

    # (b) bf16 logits (no wrapper f32 copy), reduce='sum', default (single) tile
    x_bf16 = x.astype(jnp.bfloat16)
    loss_sum = jax.block_until_ready(
        gdl_loss(x_bf16, target, smooth=0.0001, reduce="sum"))
    ref_sum = _gdl_reference(x_bf16.astype(jnp.float32), target,
                             smooth=0.0001, reduce="sum")
    assert jnp.isfinite(loss_sum), "kernel produced non-finite loss (sum)"
    assert jnp.allclose(loss_sum, ref_sum, rtol=RTOL, atol=ATOL), (loss_sum, ref_sum)

    # (c) spatial size not a multiple of 128 -> padded tail + in-kernel mask
    H2, W2 = 12, 12
    x2 = jax.random.normal(k_x2, (N, C_TOTAL, H2, W2), dtype=jnp.float32)
    target2 = jax.random.randint(k_t2, (N, H2, W2), 0, C_TOTAL, dtype=jnp.int32)
    loss_pad = jax.block_until_ready(
        gdl_loss(x2, target2, smooth=0.0001, reduce="mean"))
    ref_pad = _gdl_reference(x2, target2, smooth=0.0001, reduce="mean")
    assert jnp.isfinite(loss_pad), "kernel produced non-finite loss (padded)"
    assert jnp.allclose(loss_pad, ref_pad, rtol=RTOL, atol=ATOL), (loss_pad, ref_pad)

    print("KERNEL_OK")
</pallas_src>

<mosaic_0001>
module attributes {stable_mosaic.version = 11 : i64} {
  func.func @_gdl_kernel(%arg0: i32, %arg1: i32, %arg2: memref<1x4x128xf32, #tpu.memory_space<vmem>>, %arg3: memref<1x1x128xi32, #tpu.memory_space<vmem>>, %arg4: memref<1x1x4xf32, #tpu.memory_space<vmem>>, %arg5: memref<1x4xf32, #tpu.memory_space<vmem>>, %arg6: memref<1x4xf32, #tpu.memory_space<vmem>>, %arg7: memref<1x4xf32, #tpu.memory_space<vmem>>) attributes {dimension_semantics = [#tpu.dimension_semantics<parallel>, #tpu.dimension_semantics<arbitrary>], iteration_bounds = array<i64: 2, 2>, scalar_prefetch = 0 : i64, scratch_operands = 3 : i64, tpu.core_type = #tpu.core_type<tc>, window_params = [{transform_indices = @transform_0, window_bounds = array<i64: 1, 4, 128>}, {transform_indices = @transform_1, window_bounds = array<i64: 1, 1, 128>}, {transform_indices = @transform_2, window_bounds = array<i64: 1, 1, 4>}]} {
    %c0_i32 = arith.constant 0 : i32
    %0 = arith.cmpi eq, %arg1, %c0_i32 : i32
    %1 = arith.extui %0 : i1 to i32
    %c0_i32_0 = arith.constant 0 : i32
    %2 = arith.cmpi ne, %1, %c0_i32_0 : i32
    scf.if %2 {
      %cst_26 = arith.constant 0.000000e+00 : f32
      %38 = vector.broadcast %cst_26 : f32 to vector<1x4xf32>
      %c0_27 = arith.constant 0 : index
      %c0_28 = arith.constant 0 : index
      %39 = vector.load %arg5[%c0_27, %c0_28] : memref<1x4xf32, #tpu.memory_space<vmem>>, vector<1x4xf32>
      tpu.vector_store %arg5[%c0_27, %c0_28], %38 {strides = array<i32>} : memref<1x4xf32, #tpu.memory_space<vmem>>, vector<1x4xf32>,
      %cst_29 = arith.constant 0.000000e+00 : f32
      %40 = vector.broadcast %cst_29 : f32 to vector<1x4xf32>
      %c0_30 = arith.constant 0 : index
      %c0_31 = arith.constant 0 : index
      %41 = vector.load %arg6[%c0_30, %c0_31] : memref<1x4xf32, #tpu.memory_space<vmem>>, vector<1x4xf32>
      tpu.vector_store %arg6[%c0_30, %c0_31], %40 {strides = array<i32>} : memref<1x4xf32, #tpu.memory_space<vmem>>, vector<1x4xf32>,
      %cst_32 = arith.constant 0.000000e+00 : f32
      %42 = vector.broadcast %cst_32 : f32 to vector<1x4xf32>
      %c0_33 = arith.constant 0 : index
      %c0_34 = arith.constant 0 : index
      %43 = vector.load %arg7[%c0_33, %c0_34] : memref<1x4xf32, #tpu.memory_space<vmem>>, vector<1x4xf32>
      tpu.vector_store %arg7[%c0_33, %c0_34], %42 {strides = array<i32>} : memref<1x4xf32, #tpu.memory_space<vmem>>, vector<1x4xf32>,
    } else {
    }
    %c0 = arith.constant 0 : index
    %c0_1 = arith.constant 0 : index
    %c0_2 = arith.constant 0 : index
    %3 = vector.load %arg2[%c0, %c0_1, %c0_2] : memref<1x4x128xf32, #tpu.memory_space<vmem>>, vector<1x4x128xf32>
    %c0_3 = arith.constant 0 : index
    %c0_4 = arith.constant 0 : index
    %c0_5 = arith.constant 0 : index
    %4 = vector.load %arg3[%c0_3, %c0_4, %c0_5] : memref<1x1x128xi32, #tpu.memory_space<vmem>>, vector<1x1x128xi32>
    %cst = arith.constant dense<0xFF800000> : vector<1x128xf32>
    %5 = vector.multi_reduction <maximumf>, %3, %cst [1] : vector<1x4x128xf32> to vector<1x128xf32>
    %6 = vector.shape_cast %5 : vector<1x128xf32> to vector<1x1x128xf32>
    %7 = vector.broadcast %6 : vector<1x1x128xf32> to vector<1x4x128xf32>
    %8 = arith.subf %3, %7 : vector<1x4x128xf32>
    %9 = math.exp %8 : vector<1x4x128xf32>
    %cst_6 = arith.constant dense<0.000000e+00> : vector<1x128xf32>
    %10 = vector.multi_reduction <add>, %9, %cst_6 [1] : vector<1x4x128xf32> to vector<1x128xf32>
    %11 = vector.shape_cast %10 : vector<1x128xf32> to vector<1x1x128xf32>
    %12 = tpu.reciprocal %11 {approx = true} : vector<1x1x128xf32> -> vector<1x1x128xf32>
    %13 = vector.broadcast %12 : vector<1x1x128xf32> to vector<1x4x128xf32>
    %14 = arith.mulf %9, %13 : vector<1x4x128xf32>
    %15 = tpu.iota {dimensions = array<i32: 1>} : vector<1x4x128xi32>
    %16 = vector.broadcast %4 : vector<1x1x128xi32> to vector<1x4x128xi32>
    %17 = arith.cmpi eq, %16, %15 : vector<1x4x128xi32>
    %c0_7 = arith.constant 0 : index
    %c0_8 = arith.constant 0 : index
    %18 = vector.load %arg5[%c0_7, %c0_8] : memref<1x4xf32, #tpu.memory_space<vmem>>, vector<1x4xf32>
    %cst_9 = arith.constant 1.000000e+00 : f32
    %cst_10 = arith.constant 0.000000e+00 : f32
    %19 = vector.broadcast %cst_9 : f32 to vector<1x4x128xf32>
    %20 = vector.broadcast %cst_10 : f32 to vector<1x4x128xf32>
    %21 = arith.select %17, %19, %20 : vector<1x4x128xi1>, vector<1x4x128xf32>
    %cst_11 = arith.constant dense<0.000000e+00> : vector<1x4xf32>
    %22 = vector.multi_reduction <add>, %21, %cst_11 [2] : vector<1x4x128xf32> to vector<1x4xf32>
    %23 = arith.addf %18, %22 : vector<1x4xf32>
    %c0_12 = arith.constant 0 : index
    %c0_13 = arith.constant 0 : index
    %24 = vector.load %arg5[%c0_12, %c0_13] : memref<1x4xf32, #tpu.memory_space<vmem>>, vector<1x4xf32>
    tpu.vector_store %arg5[%c0_12, %c0_13], %23 {strides = array<i32>} : memref<1x4xf32, #tpu.memory_space<vmem>>, vector<1x4xf32>,
    %c0_14 = arith.constant 0 : index
    %c0_15 = arith.constant 0 : index
    %25 = vector.load %arg6[%c0_14, %c0_15] : memref<1x4xf32, #tpu.memory_space<vmem>>, vector<1x4xf32>
    %cst_16 = arith.constant dense<0.000000e+00> : vector<1x4xf32>
    %26 = vector.multi_reduction <add>, %14, %cst_16 [2] : vector<1x4x128xf32> to vector<1x4xf32>
    %27 = arith.addf %25, %26 : vector<1x4xf32>
    %c0_17 = arith.constant 0 : index
    %c0_18 = arith.constant 0 : index
    %28 = vector.load %arg6[%c0_17, %c0_18] : memref<1x4xf32, #tpu.memory_space<vmem>>, vector<1x4xf32>
    tpu.vector_store %arg6[%c0_17, %c0_18], %27 {strides = array<i32>} : memref<1x4xf32, #tpu.memory_space<vmem>>, vector<1x4xf32>,
    %c0_19 = arith.constant 0 : index
    %c0_20 = arith.constant 0 : index
    %29 = vector.load %arg7[%c0_19, %c0_20] : memref<1x4xf32, #tpu.memory_space<vmem>>, vector<1x4xf32>
    %cst_21 = arith.constant 0.000000e+00 : f32
    %30 = vector.broadcast %cst_21 : f32 to vector<1x4x128xf32>
    %31 = arith.select %17, %14, %30 : vector<1x4x128xi1>, vector<1x4x128xf32>
    %cst_22 = arith.constant dense<0.000000e+00> : vector<1x4xf32>
    %32 = vector.multi_reduction <add>, %31, %cst_22 [2] : vector<1x4x128xf32> to vector<1x4xf32>
    %33 = arith.addf %29, %32 : vector<1x4xf32>
    %c0_23 = arith.constant 0 : index
    %c0_24 = arith.constant 0 : index
    %34 = vector.load %arg7[%c0_23, %c0_24] : memref<1x4xf32, #tpu.memory_space<vmem>>, vector<1x4xf32>
    tpu.vector_store %arg7[%c0_23, %c0_24], %33 {strides = array<i32>} : memref<1x4xf32, #tpu.memory_space<vmem>>, vector<1x4xf32>,
    %c1_i32 = arith.constant 1 : i32
    %35 = arith.cmpi eq, %arg1, %c1_i32 : i32
    %36 = arith.extui %35 : i1 to i32
    %c0_i32_25 = arith.constant 0 : i32
    %37 = arith.cmpi ne, %36, %c0_i32_25 : i32
    scf.if %37 {
      %c0_26 = arith.constant 0 : index
      %c0_27 = arith.constant 0 : index
      %38 = vector.load %arg5[%c0_26, %c0_27] : memref<1x4xf32, #tpu.memory_space<vmem>>, vector<1x4xf32>
      %c0_28 = arith.constant 0 : index
      %c0_29 = arith.constant 0 : index
      %39 = vector.load %arg6[%c0_28, %c0_29] : memref<1x4xf32, #tpu.memory_space<vmem>>, vector<1x4xf32>
      %c0_30 = arith.constant 0 : index
      %c0_31 = arith.constant 0 : index
      %40 = vector.load %arg7[%c0_30, %c0_31] : memref<1x4xf32, #tpu.memory_space<vmem>>, vector<1x4xf32>
      %41 = arith.mulf %38, %38 : vector<1x4xf32>
      %cst_32 = arith.constant 9.99999974E-5 : f32
      %42 = vector.broadcast %cst_32 : f32 to vector<1x4xf32>
      %43 = arith.addf %41, %42 : vector<1x4xf32>
      %cst_33 = arith.constant 1.000000e+00 : f32
      %44 = vector.broadcast %cst_33 : f32 to vector<1x4xf32>
      %45 = arith.divf %44, %43 : vector<1x4xf32>
      %46 = arith.mulf %45, %40 : vector<1x4xf32>
      %47 = arith.addf %39, %38 : vector<1x4xf32>
      %cst_34 = arith.constant 2.000000e+00 : f32
      %48 = vector.broadcast %cst_34 : f32 to vector<1x4xf32>
      %49 = arith.mulf %48, %45 : vector<1x4xf32>
      %50 = arith.mulf %49, %46 : vector<1x4xf32>
      %cst_35 = arith.constant 9.99999974E-5 : f32
      %51 = vector.broadcast %cst_35 : f32 to vector<1x4xf32>
      %52 = arith.addf %50, %51 : vector<1x4xf32>
      %53 = arith.mulf %45, %47 : vector<1x4xf32>
      %cst_36 = arith.constant 9.99999974E-5 : f32
      %54 = vector.broadcast %cst_36 : f32 to vector<1x4xf32>
      %55 = arith.addf %53, %54 : vector<1x4xf32>
      %56 = arith.divf %52, %55 : vector<1x4xf32>
      %57 = vector.shape_cast %56 : vector<1x4xf32> to vector<1x1x4xf32>
      %c0_37 = arith.constant 0 : index
      %c0_38 = arith.constant 0 : index
      %c0_39 = arith.constant 0 : index
      %58 = vector.load %arg4[%c0_37, %c0_38, %c0_39] : memref<1x1x4xf32, #tpu.memory_space<vmem>>, vector<1x1x4xf32>
      tpu.vector_store %arg4[%c0_37, %c0_38, %c0_39], %57 {strides = array<i32>} : memref<1x1x4xf32, #tpu.memory_space<vmem>>, vector<1x1x4xf32>,
    } else {
    }
    return
  }
  func.func @transform_0(%arg0: i32, %arg1: i32) -> (i32, i32, i32) {
    %c0_i32 = arith.constant 0 : i32
    %c0_i32_0 = arith.constant 0 : i32
    return %arg0, %c0_i32, %arg1 : i32, i32, i32
  }
  func.func @transform_1(%arg0: i32, %arg1: i32) -> (i32, i32, i32) {
    %c0_i32 = arith.constant 0 : i32
    %c0_i32_0 = arith.constant 0 : i32
    return %arg0, %c0_i32, %arg1 : i32, i32, i32
  }
  func.func @transform_2(%arg0: i32, %arg1: i32) -> (i32, i32, i32) {
    %c0_i32 = arith.constant 0 : i32
    %c0_i32_0 = arith.constant 0 : i32
    %c0_i32_1 = arith.constant 0 : i32
    return %arg0, %c0_i32, %c0_i32_0 : i32, i32, i32
  }
}

</mosaic_0001>

<llo_original>
// kernel: tpu_custom_call.1
$region0: #{tpu_custom_call.1}
  #allocation0 [shape = 'u32[]', space=smem, size = 0x4, offset = 0x4, fixed_abs, tag = 'smem constant byte address 0x4 - core index']
  #allocation1 [shape = 'u32[72,128]{1,0:T(1,128)}', space=vmem, size = 0x9000, scoped, tag = 'internal scratch']
  #allocation2 [shape = 'f32[1,4]{1,0:T(1,128)}', space=vmem, size = 0x200, scoped, tag = 'scratch operand']
  #allocation3 [shape = 'f32[1,4]{1,0:T(1,128)}', space=vmem, size = 0x200, scoped, tag = 'scratch operand']
  #allocation4 [shape = 'f32[1,4]{1,0:T(1,128)}', space=vmem, size = 0x200, scoped, tag = 'scratch operand']
  %s0 = inlined_call_operand.hbm [shape: f32[2,4,256], index: 0, kind: input, shape index: {}]
  %s1 = inlined_call_operand.hbm [shape: s32[2,1,256], index: 1, kind: input, shape index: {}]
  %s2 = inlined_call_operand.hbm [shape: f32[2,1,4], index: 2, kind: output, shape index: {}]
  %s3 = sld [smem:[#allocation0]]
  $region57: #{tpu_custom_call.1} parent=0
    _
  %s5 = ssub.s32 1, %s3
  %s6 = scalar_select 0, %s5, %s3
  $region1: #{tpu_custom_call.1} parent=0
    #allocation5 [shape = 'u8[4096]{0}', space=vmem, size = 0x1000, scoped, tag = 'input window, operand 0']
    #allocation6 [shape = 's32[2]{0}', space=sflag, size = 0x8, scoped, tag = 'scoped memory for tpu_custom_call.1']
    #allocation7 [shape = 's32[2]{0}', space=sflag, size = 0x8, scoped, tag = 'scoped memory for tpu_custom_call.1']
    #allocation8 [shape = 'u8[1024]{0}', space=vmem, size = 0x400, scoped, tag = 'input window, operand 1']
    #allocation9 [shape = 's32[2]{0}', space=sflag, size = 0x8, scoped, tag = 'scoped memory for tpu_custom_call.1']
    #allocation10 [shape = 'u8[1024]{0}', space=vmem, size = 0x400, scoped, tag = 'output window, operand 0']
    %7 = vsyncpa [#allocation6], 0
    %s8 = scalar_lea.sflag [#allocation6], 1
    %9 = vsyncpa %s8, 0
    %10 = vsyncpa [#allocation9], 0
    %s11 = scalar_lea.sflag [#allocation9], 1
    %12 = vsyncpa %s11, 0
    %13 = vsyncpa [#allocation7], 0
    %s14 = scalar_lea.sflag [#allocation7], 1
    %15 = vsyncpa %s14, 0
    loop: start=0, step=1, limit=6
    $region2: #{tpu_custom_call.1} parent=1 // loop_pre_header
      _
    $region3: #{tpu_custom_call.1} parent=1 // loop_header
      %s17 = sphi 0, %s21
      %p18 = scmp.ge.s32.totalorder %s17, 6
      %s24 = sphi 0, %s36
      %s25 = sphi 0, %s32
      %s26 = sphi 0, %s24
      %s27 = sphi 0, %s25
      %s28 = sphi 0, %s26
      %s29 = sphi 0, %s27
      %s41 = sphi 0, %s43
      %s44 = sphi 0, %s41
      %s45 = sphi 0, %s44
      %s61 = sphi 0, %s45
      %s69 = sphi 0, %s71
      %s72 = sphi 0, %s69
      %s73 = sphi 0, %s72
      %s89 = sphi 0, %s73
      %s95 = sphi 0, %s97
      %s98 = sphi 0, %s95
      %s99 = sphi 0, %s98
      %s115 = sphi 0, %s99
    $region4: #{tpu_custom_call.1} parent=1 // loop_header_branch
      %20 = sbr.rel (%p18) target = $region8
    $region5: #{tpu_custom_call.1} parent=1 // loop_body
      %s22 = ssub.s32 %s17, 1
      %s23 = ssub.s32 %s17, 2
      %s30 = sadd.s32 1, %s25
      %p31 = scmp.ge.s32.totalorder %s30, 2
      %s32 = scalar_select %p31, 0, %s30
      %s33 = sadd.s32 1, %s24
      %s34 = scalar_select %p31, %s33, %s24
      %p35 = scmp.ge.s32.totalorder %s34, 2
      %s36 = scalar_select %p35, 0, %s34
      %s37 = ssub.s32 %s24, %s36
      %s38 = ssub.s32 %s25, %s32
      %s39 = sor.u32 %s37, %s38
      %p40 = scmp.eq.s32.totalorder %s39, 0
      %s42 = sadd.s32 %s41, 1
      %s43 = scalar_select %p40, %s41, %s42
      %p46 = pneg %p40
      %p47 = scmp.eq.s32.totalorder %s17, 3
      %p48 = por %p46, %p47
      %p49 = scmp.ne.s32.totalorder %s41, %s44
      %p50 = scmp.eq.s32.totalorder %s17, 0
      %p51 = por %p49, %p50
      %p52 = scmp.ne.s32.totalorder %s41, %s44
      %p53 = scmp.eq.s32.totalorder %s22, 3
      %p54 = por %p52, %p53
      %p55 = scmp.ne.s32.totalorder %s44, %s45
      %p56 = scmp.eq.s32.totalorder %s22, 0
      %p57 = por %p55, %p56
      %p58 = scmp.ne.s32.totalorder %s44, %s45
      %p59 = scmp.eq.s32.totalorder %s23, 3
      %p60 = por %p58, %p59
      %p62 = scmp.ne.s32.totalorder %s45, %s61
      %p63 = scmp.eq.s32.totalorder %s23, 0
      %p64 = por %p62, %p63
      %s65 = ssub.s32 %s24, %s36
      %s66 = ssub.s32 %s25, %s32
      %s67 = sor.u32 %s65, %s66
      %p68 = scmp.eq.s32.totalorder %s67, 0
      %s70 = sadd.s32 %s69, 1
      %s71 = scalar_select %p68, %s69, %s70
      %p74 = pneg %p68
      %p75 = scmp.eq.s32.totalorder %s17, 3
      %p76 = por %p74, %p75
      %p77 = scmp.ne.s32.totalorder %s69, %s72
      %p78 = scmp.eq.s32.totalorder %s17, 0
      %p79 = por %p77, %p78
      %p80 = scmp.ne.s32.totalorder %s69, %s72
      %p81 = scmp.eq.s32.totalorder %s22, 3
      %p82 = por %p80, %p81
      %p83 = scmp.ne.s32.totalorder %s72, %s73
      %p84 = scmp.eq.s32.totalorder %s22, 0
      %p85 = por %p83, %p84
      %p86 = scmp.ne.s32.totalorder %s72, %s73
      %p87 = scmp.eq.s32.totalorder %s23, 3
      %p88 = por %p86, %p87
      %p90 = scmp.ne.s32.totalorder %s73, %s89
      %p91 = scmp.eq.s32.totalorder %s23, 0
      %p92 = por %p90, %p91
      %s93 = ssub.s32 %s24, %s36
      %p94 = scmp.eq.s32.totalorder %s93, 0
      %s96 = sadd.s32 %s95, 1
      %s97 = scalar_select %p94, %s95, %s96
      %p100 = pneg %p94
      %p101 = scmp.eq.s32.totalorder %s17, 3
      %p102 = por %p100, %p101
      %p103 = scmp.ne.s32.totalorder %s95, %s98
      %p104 = scmp.eq.s32.totalorder %s17, 0
      %p105 = por %p103, %p104
      %p106 = scmp.ne.s32.totalorder %s95, %s98
      %p107 = scmp.eq.s32.totalorder %s22, 3
      %p108 = por %p106, %p107
      %p109 = scmp.ne.s32.totalorder %s98, %s99
      %p110 = scmp.eq.s32.totalorder %s22, 0
      %p111 = por %p109, %p110
      %p112 = scmp.ne.s32.totalorder %s98, %s99
      %p113 = scmp.eq.s32.totalorder %s23, 3
      %p114 = por %p112, %p113
      %p116 = scmp.ne.s32.totalorder %s99, %s115
      %p117 = scmp.eq.s32.totalorder %s23, 0
      %p118 = por %p116, %p117
      %p119 = scmp.le.s32.totalorder 1, %s17
      %p120 = scmp.lt.s32.totalorder %s17, 5
      %p121 = pnand %p119, %p120
      %p122 = pneg %p121
      // Predicated region
      $region9: #{tpu_custom_call.1} parent=5 // pred_check
        _
      $region10: #{tpu_custom_call.1} parent=5 // pred_check_branch
        %124 = sbr.rel (%p121) target = $region12
      $region11: #{tpu_custom_call.1} parent=5 // pred_region
        %s125 = ssub.s32 %s17, 1
      $region12: #{tpu_custom_call.1} parent=5 // pred_fallthru
        _
      %p126 = scmp.lt.s32.totalorder %s17, 4
      // Predicated region
      $region13: #{tpu_custom_call.1} parent=5 // pred_check
        %p127 = pneg %p126
      $region14: #{tpu_custom_call.1} parent=5 // pred_check_branch
        %129 = sbr.rel (%p127) target = $region16
      $region15: #{tpu_custom_call.1} parent=5 // pred_region
        // Predicated region
        $region17: #{tpu_custom_call.1} parent=15 // pred_check
          %p130 = pneg %p51
        $region18: #{tpu_custom_call.1} parent=15 // pred_check_branch
          %132 = sbr.rel (%p130) target = $region20
        $region19: #{tpu_custom_call.1} parent=15 // pred_region
          %s133 = sand.u32 %s41, 1
          %s134 = scalar_lea.sflag [#allocation6], %s133
          %s135 = sand.u32 %s41, 1
          %s136 = smul.addr %s135, 4
          %s137 = scalar_lea.vmem [#allocation5], %s136
          %139 = vsyncadd %s134, 0
          %s140 = smul.addr %s24, 2
          %s141 = sadd.s32 %s25, %s140
          %s142 = smul.addr %s141, 4
          %s143 = scalar_lea.hbm %s0, %s142
          %s145 = sshll.u32 %s143, 4
          %s146 = int_to_ptr.hbm [resolvable:$true] %s145
          %s147 = sshll.u32 %s137, 4
          %s148 = int_to_ptr.vmem [resolvable:$true] %s147
          %150 = dma.hbm_to_vmem [thread:$0]  %s146, 64, %s148, %s134
        $region20: #{tpu_custom_call.1} parent=15 // pred_fallthru
          _
        // Predicated region
        $region21: #{tpu_custom_call.1} parent=15 // pred_check
          %p151 = pneg %p79
        $region22: #{tpu_custom_call.1} parent=15 // pred_check_branch
          %153 = sbr.rel (%p151) target = $region24
        $region23: #{tpu_custom_call.1} parent=15 // pred_region
          %s154 = sand.u32 %s69, 1
          %s155 = scalar_lea.sflag [#allocation9], %s154
          %s156 = sand.u32 %s69, 1
          %s157 = scalar_lea.vmem [#allocation8], %s156
          %159 = vsyncadd %s155, 0
          %s160 = smul.addr %s24, 2
          %s161 = sadd.s32 %s25, %s160
          %s162 = scalar_lea.hbm %s1, %s161
          %s164 = sshll.u32 %s162, 4
          %s165 = int_to_ptr.hbm [resolvable:$true] %s164
          %s166 = sshll.u32 %s157, 4
          %s167 = int_to_ptr.vmem [resolvable:$true] %s166
          %169 = dma.hbm_to_vmem [thread:$0]  %s165, 16, %s167, %s155
        $region24: #{tpu_custom_call.1} parent=15 // pred_fallthru
          _
      $region16: #{tpu_custom_call.1} parent=5 // pred_fallthru
        _
      %p170 = scmp.le.s32.totalorder 1, %s17
      %p171 = scmp.lt.s32.totalorder %s17, 5
      %p172 = pnand %p170, %p171
      %p173 = pneg %p172
      // Predicated region
      $region25: #{tpu_custom_call.1} parent=5 // pred_check
        _
      $region26: #{tpu_custom_call.1} parent=5 // pred_check_branch
        %175 = sbr.rel (%p172) target = $region28
      $region27: #{tpu_custom_call.1} parent=5 // pred_region
        %s176 = ssub.s32 %s17, 1
        %s177 = sand.u32 %s44, 1
        %s178 = scalar_lea.sflag [#allocation6], %s177
        %s179 = sand.u32 %s44, 1
        %s180 = smul.addr %s179, 4
        %s181 = scalar_lea.vmem [#allocation5], %s180
        // Predicated region
        $region29: #{tpu_custom_call.1} parent=27 // pred_check
          %p182 = pneg %p57
        $region30: #{tpu_custom_call.1} parent=27 // pred_check_branch
          %184 = sbr.rel (%p182) target = $region32
        $region31: #{tpu_custom_call.1} parent=27 // pred_region
          %186 = dma.done %s178, 64
        $region32: #{tpu_custom_call.1} parent=27 // pred_fallthru
          _
        %s187 = sand.u32 %s72, 1
        %s188 = scalar_lea.sflag [#allocation9], %s187
        %s189 = sand.u32 %s72, 1
        %s190 = scalar_lea.vmem [#allocation8], %s189
        // Predicated region
        $region33: #{tpu_custom_call.1} parent=27 // pred_check
          %p191 = pneg %p85
        $region34: #{tpu_custom_call.1} parent=27 // pred_check_branch
          %193 = sbr.rel (%p191) target = $region36
        $region35: #{tpu_custom_call.1} parent=27 // pred_region
          %195 = dma.done %s188, 16
        $region36: #{tpu_custom_call.1} parent=27 // pred_fallthru
          _
        %s196 = sand.u32 %s44, 1
        %s197 = scalar_lea.sflag [#allocation6], %s196
        %s198 = sand.u32 %s44, 1
        %s199 = smul.addr %s198, 4
        %s200 = scalar_lea.vmem [#allocation5], %s199
        %p201 = pneg %p57
        %p202 = pneg %p54
        %s203 = sand.u32 %s72, 1
        %s204 = scalar_lea.sflag [#allocation9], %s203
        %s205 = sand.u32 %s72, 1
        %s206 = scalar_lea.vmem [#allocation8], %s205
        %p207 = pneg %p85
        %p208 = pneg %p82
        %p209 = pneg %p111
        %p210 = pneg %p108
        %s211 = sand.u32 %s98, 1
        %s212 = scalar_lea.sflag [#allocation7], %s211
        %s213 = sand.u32 %s98, 1
        %s214 = scalar_lea.vmem [#allocation10], %s213
        %p215 = scmp.eq.s32.totalorder %s27, 0
        // Predicated region
        $region37: #{tpu_custom_call.1} parent=27 // pred_check
          %p216 = pneg %p215
        $region38: #{tpu_custom_call.1} parent=27 // pred_check_branch
          %218 = sbr.rel (%p216) target = $region40
        $region39: #{tpu_custom_call.1} parent=27 // pred_region
          %vm219 = vcmask 24576
          %220 = vst.msk [vmem:[#allocation2] sm:$0x1] %vm219, 0.0
          %221 = vst.msk [vmem:[#allocation3] sm:$0x1] %vm219, 0.0
          %222 = vst.msk [vmem:[#allocation4] sm:$0x1] %vm219, 0.0
        $region40: #{tpu_custom_call.1} parent=27 // pred_fallthru
          _
        %v223 = vld [vmem:[%s181] sm:$0xf]
        %v224 = vld [vmem:[%s190] sm:$0x1]
        %vm225 = vcmask 1043456
        %v226 = vsel %vm225, %v223, -inf
        %v227 = vrot.slane %v226, 4
        %v228 = vmax.f32 %v226, %v227
        %v229 = vrot.slane %v228, 2
        %v230 = vmax.f32 %v228, %v229
        %v231 = vrot.slane %v230, 1
        %v232 = vmax.f32 %v230, %v231
        %v233 = vsub.f32 %v223, %v232
        %v234 = vmul.f32 %v233, 1.442695
        %v235 = vpow.pop %v234
        %v236 = vsel %vm225, %v235, 0.0
        %v237 = vrot.slane %v236, 4
        %v238 = vadd.f32 %v236, %v237
        %v239 = vrot.slane %v238, 2
        %v240 = vadd.f32 %v238, %v239
        %v241 = vrot.slane %v240, 1
        %v242 = vadd.f32 %v240, %v241
        %v243 = vrcp.pop %v242
        %v244 = vmul.f32 %v235, %v243
        %v245 = vlaneseq
        %v246 = vshrl.u32 %v245, 7
        %v247 = vperm.slane %v224, 0
        %vm248 = vcmp.eq.s32.totalorder %v247, %v246
        %v249 = vld [vmem:[#allocation2] sm:$0x1]
        %v250 = vsel %vm248, 1.0, 0.0
        %v251 = vsel %vm225, %v250, 0.0
        %252 = vadd.xlane.f32.xlu0 %v251
        %v253 = vpop.xlane.xlu0 %252
        %v255 = vperm.slane %v253, 0
        %v256 = vperm.slane %v253, 1
        %v257 = vperm.slane %v253, 2
        %v258 = vperm.slane %v253, 3
        %259 = vst [vmem:[#allocation1] ss:$9 sm:$0xff] %v255
        %s260 = scalar_lea.vmem [#allocation1], 1
        %261 = vst [vmem:[%s260] ss:$9 sm:$0xff] %v256
        %s262 = scalar_lea.vmem [#allocation1], 2
        %263 = vst [vmem:[%s262] ss:$9 sm:$0xff] %v257
        %s264 = scalar_lea.vmem [#allocation1], 3
        %265 = vst [vmem:[%s264] ss:$9 sm:$0xff] %v258
        %v266 = vld [vmem:[#allocation1] sm:$0xff]
        %267 = vset.pattern.permute.xlu0 0
        %268 = vperm.xlu0 %267, %v266
        %v269 = vpop.permute.xlu0 %268
        %v270 = vlaneseq
        %v271 = vand.u32 %v270, 127
        %v272 = vperm.slane %v269, %v271
        %v274 = vadd.f32 %v249, %v272
        %vm275 = vcmask 24576
        %276 = vst.msk [vmem:[#allocation2] sm:$0x1] %vm275, %v274
        %v277 = vld [vmem:[#allocation3] sm:$0x1]
        %v278 = vsel %vm225, %v244, 0.0
        %279 = vadd.xlane.f32.xlu0 %v278
        %v280 = vpop.xlane.xlu0 %279
        %v282 = vperm.slane %v280, 0
        %v283 = vperm.slane %v280, 1
        %v284 = vperm.slane %v280, 2
        %v285 = vperm.slane %v280, 3
        %286 = vst [vmem:[#allocation1] ss:$9 sm:$0xff] %v282
        %s287 = scalar_lea.vmem [#allocation1], 1
        %288 = vst [vmem:[%s287] ss:$9 sm:$0xff] %v283
        %s289 = scalar_lea.vmem [#allocation1], 2
        %290 = vst [vmem:[%s289] ss:$9 sm:$0xff] %v284
        %s291 = scalar_lea.vmem [#allocation1], 3
        %292 = vst [vmem:[%s291] ss:$9 sm:$0xff] %v285
        %v293 = vld [vmem:[#allocation1] sm:$0xff]
        %294 = vset.pattern.permute.xlu0 0
        %295 = vperm.xlu0 %294, %v293
        %v296 = vpop.permute.xlu0 %295
        %v297 = vperm.slane %v296, %v271
        %v299 = vadd.f32 %v277, %v297
        %300 = vst.msk [vmem:[#allocation3] sm:$0x1] %vm275, %v299
        %v301 = vld [vmem:[#allocation4] sm:$0x1]
        %v302 = vsel %vm248, %v244, 0.0
        %v303 = vsel %vm225, %v302, 0.0
        %304 = vadd.xlane.f32.xlu0 %v303
        %v305 = vpop.xlane.xlu0 %304
        %v307 = vperm.slane %v305, 0
        %v308 = vperm.slane %v305, 1
        %v309 = vperm.slane %v305, 2
        %v310 = vperm.slane %v305, 3
        %311 = vst [vmem:[#allocation1] ss:$9 sm:$0xff] %v307
        %s312 = scalar_lea.vmem [#allocation1], 1
        %313 = vst [vmem:[%s312] ss:$9 sm:$0xff] %v308
        %s314 = scalar_lea.vmem [#allocation1], 2
        %315 = vst [vmem:[%s314] ss:$9 sm:$0xff] %v309
        %s316 = scalar_lea.vmem [#allocation1], 3
        %317 = vst [vmem:[%s316] ss:$9 sm:$0xff] %v310
        %v318 = vld [vmem:[#allocation1] sm:$0xff]
        %319 = vset.pattern.permute.xlu0 0
        %320 = vperm.xlu0 %319, %v318
        %v321 = vpop.permute.xlu0 %320
        %v322 = vperm.slane %v321, %v271
        %v324 = vadd.f32 %v301, %v322
        %325 = vst.msk [vmem:[#allocation4] sm:$0x1] %vm275, %v324
        %p326 = scmp.eq.s32.totalorder %s27, 1
        // Predicated region
        $region41: #{tpu_custom_call.1} parent=27 // pred_check
          %p327 = pneg %p326
        $region42: #{tpu_custom_call.1} parent=27 // pred_check_branch
          %329 = sbr.rel (%p327) target = $region44
        $region43: #{tpu_custom_call.1} parent=27 // pred_region
          %v330 = vld [vmem:[#allocation2] sm:$0x1]
          %v331 = vld [vmem:[#allocation3] sm:$0x1]
          %v332 = vld [vmem:[#allocation4] sm:$0x1]
          %v333 = vmul.f32 %v330, %v330
          %v334 = vadd.f32 %v333, 0.0001
          %v335 = vrcp.pop %v334
          %v336 = vmul.f32 %v334, %v335
          %v337 = vsub.f32 1.0, %v336
          %v338 = vmul.f32 %v335, %v337
          %v339 = vadd.f32 %v335, %v338
          %vm340 = vweird.f32 %v334
          %vm341 = vweird.f32 %v335
          %vm342 = vmor %vm340, %vm341
          %v343 = vsel %vm342, %v335, %v339
          %v344 = vand.u32 2147483647, %v334
          %vm345 = vcmp.eq.f32.partialorder %v344, 8.507059e+37
          %v346 = vand.u32 %v334, 2147483648
          %v347 = vor.u32 1.1754944e-38, %v346
          %v348 = vsel %vm345, %v347, %v343
          %v349 = vmul.f32 1.0, %v348
          %v350 = vmul.f32 %v349, %v332
          %v351 = vadd.f32 %v331, %v330
          %v352 = vmul.f32 %v349, 2.0
          %v353 = vmul.f32 %v352, %v350
          %v354 = vadd.f32 %v353, 0.0001
          %v355 = vmul.f32 %v349, %v351
          %v356 = vadd.f32 %v355, 0.0001
          %v357 = vrcp.pop %v356
          %v358 = vmul.f32 %v356, %v357
          %v359 = vsub.f32 1.0, %v358
          %v360 = vmul.f32 %v357, %v359
          %v361 = vadd.f32 %v357, %v360
          %vm362 = vweird.f32 %v356
          %vm363 = vweird.f32 %v357
          %vm364 = vmor %vm362, %vm363
          %v365 = vsel %vm364, %v357, %v361
          %v366 = vand.u32 2147483647, %v356
          %vm367 = vcmp.eq.f32.partialorder %v366, 8.507059e+37
          %v368 = vand.u32 %v356, 2147483648
          %v369 = vor.u32 1.1754944e-38, %v368
          %v370 = vsel %vm367, %v369, %v365
          %v371 = vmul.f32 %v354, %v370
          %372 = vst.msk [vmem:[%s214] sm:$0x1] %vm275, %v371
        $region44: #{tpu_custom_call.1} parent=27 // pred_fallthru
          _
        %s373 = sand.u32 %s98, 1
        %s374 = scalar_lea.sflag [#allocation7], %s373
        %s375 = sand.u32 %s98, 1
        %s376 = scalar_lea.vmem [#allocation10], %s375
        // Predicated region
        $region45: #{tpu_custom_call.1} parent=27 // pred_check
          %p377 = pneg %p108
        $region46: #{tpu_custom_call.1} parent=27 // pred_check_branch
          %379 = sbr.rel (%p377) target = $region48
        $region47: #{tpu_custom_call.1} parent=27 // pred_region
          %381 = vsyncadd %s374, 0
          %s382 = scalar_lea.hbm %s2, %s26
          %s384 = sshll.u32 %s376, 4
          %s385 = int_to_ptr.vmem [resolvable:$true] %s384
          %s386 = sshll.u32 %s382, 4
          %s387 = int_to_ptr.hbm [resolvable:$true] %s386
          %389 = dma.vmem_to_hbm [thread:$0]  %s385, 16, %s387, %s374
        $region48: #{tpu_custom_call.1} parent=27 // pred_fallthru
          _
      $region28: #{tpu_custom_call.1} parent=5 // pred_fallthru
        _
      %p390 = scmp.le.s32.totalorder 2, %s17
      // Predicated region
      $region49: #{tpu_custom_call.1} parent=5 // pred_check
        %p391 = pneg %p390
      $region50: #{tpu_custom_call.1} parent=5 // pred_check_branch
        %393 = sbr.rel (%p391) target = $region52
      $region51: #{tpu_custom_call.1} parent=5 // pred_region
        %s394 = ssub.s32 %s17, 2
        // Predicated region
        $region53: #{tpu_custom_call.1} parent=51 // pred_check
          %p395 = pneg %p114
        $region54: #{tpu_custom_call.1} parent=51 // pred_check_branch
          %397 = sbr.rel (%p395) target = $region56
        $region55: #{tpu_custom_call.1} parent=51 // pred_region
          %s398 = sand.u32 %s99, 1
          %s399 = scalar_lea.sflag [#allocation7], %s398
          %s400 = sand.u32 %s99, 1
          %s401 = scalar_lea.vmem [#allocation10], %s400
          %403 = dma.done %s399, 16
        $region56: #{tpu_custom_call.1} parent=51 // pred_fallthru
          _
      $region52: #{tpu_custom_call.1} parent=5 // pred_fallthru
        _
    $region6: #{tpu_custom_call.1} parent=1 // loop_footer
      %s21 = sadd.s32 1, %s17
    $region7: #{tpu_custom_call.1} parent=1 // loop_footer_branch
      %16 = sbr.rel target = $region3
    $region8: #{tpu_custom_call.1} parent=1 // loop_exit
      _
    %404 = vsyncpa [#allocation6], 1
    %s405 = scalar_lea.sflag [#allocation6], 1
    %406 = vsyncpa %s405, 1
    %407 = vsyncpa [#allocation9], 1
    %s408 = scalar_lea.sflag [#allocation9], 1
    %409 = vsyncpa %s408, 1
    %410 = vsyncpa [#allocation7], 1
    %s411 = scalar_lea.sflag [#allocation7], 1
    %412 = vsyncpa %s411, 1

</llo_original>
